<compile_context>
chip_gen: v7x
topology: tpu7x:2x2x1
jax: 0.10.0
libtpu: 0.0.40
codegen_flags: <defaults>
</compile_context>

<pallas_src>
import functools

import jax
import jax.numpy as jnp
from jax.experimental import pallas as pl
from jax.experimental.pallas import tpu as pltpu


def _round_up(a, b):
    return (a + b - 1) // b * b


# ----------------------------- Pallas kernel -------------------------------

def meta_gru_kernel(feat_ref, h_ref, w_ref, b_ref, out_ref):
    hp = out_ref.shape[-1]  # padded (lane-dense) hidden width, static

    # Single fused matmul for all gates; f32 accumulation on the MXU.
    g = jnp.dot(feat_ref[...], w_ref[...],
                preferred_element_type=jnp.float32) + b_ref[...]

    # Column blocks are 128-lane aligned -> slices are relayout-free.
    rz = jax.nn.sigmoid(g[:, :2 * hp])               # r and z in one EUP slab
    r = rz[:, :hp]
    z = rz[:, hp:2 * hp]
    c = jnp.tanh(g[:, 2 * hp:3 * hp] + r * g[:, 3 * hp:4 * hp])

    h = h_ref[...].astype(jnp.float32)
    # (1-z)*c + z*h  ==  c + z*(h - c)   (one fewer VPU op)
    out_ref[...] = (c + z * (h - c)).astype(out_ref.dtype)


def meta_gru_pallas(feat, h_pad, w_all, b_all, *, tm):
    """feat: [Mp, Fp], h_pad: [Mp, Hp], w_all: [Fp, 4*Hp], b_all: [1, 4*Hp]."""
    Mp, Fp = feat.shape
    hp = h_pad.shape[-1]
    assert Mp % tm == 0
    grid = (Mp // tm,)

    itemsize = jnp.dtype(feat.dtype).itemsize
    cost = pl.CostEstimate(
        flops=2 * Mp * Fp * 4 * hp,
        transcendentals=3 * Mp * hp,
        bytes_accessed=(Mp * Fp * itemsize + Mp * hp * 4
                        + Fp * 4 * hp * jnp.dtype(w_all.dtype).itemsize
                        + 4 * hp * 4 + Mp * hp * 4),
    )

    # Weight / bias index_maps are constant -> no re-DMA across grid steps.
    # (For very large hidden_dim on v7x, additionally single-buffer them /
    #  tile the 4*Hp column axis to fit the 64 MiB VMEM budget.)
    return pl.pallas_call(
        meta_gru_kernel,
        out_shape=jax.ShapeDtypeStruct((Mp, hp), h_pad.dtype),
        grid=grid,
        in_specs=[
            pl.BlockSpec((tm, Fp), lambda i: (i, 0)),
            pl.BlockSpec((tm, hp), lambda i: (i, 0)),
            pl.BlockSpec((Fp, 4 * hp), lambda i: (0, 0)),
            pl.BlockSpec((1, 4 * hp), lambda i: (0, 0)),
        ],
        out_specs=pl.BlockSpec((tm, hp), lambda i: (i, 0)),
        compiler_params=pltpu.CompilerParams(
            dimension_semantics=("parallel",)),
        cost_estimate=cost,
    )(feat, h_pad, w_all, b_all)


# --------------------- jitted end-to-end forward ----------------------------

@functools.partial(jax.jit, static_argnames=("matmul_dtype",))
def meta_gru_forward(meta_knowledge, x, hidden, W_all, b_all, *,
                     matmul_dtype=jnp.float32):
    B, N, I = x.shape
    H = hidden.shape[-1]
    K = meta_knowledge.shape[-1]
    Hp = W_all.shape[-1] // 4
    Fp = W_all.shape[0]
    M = B * N
    F = I * K + I + H * K + H + K

    mk = meta_knowledge.reshape(M, K).astype(jnp.float32)
    xf = x.reshape(M, I).astype(jnp.float32)
    hf = hidden.reshape(M, H).astype(jnp.float32)

    # feat = [x(x)mk | x | h(x)mk | h | mk]; the outer products are cheap
    # packing that fuses under jit — all heavy math (one wide matmul + gating)
    # runs inside the Pallas kernel.
    xm = (xf[:, :, None] * mk[:, None, :]).reshape(M, I * K)
    hm = (hf[:, :, None] * mk[:, None, :]).reshape(M, H * K)
    feat = jnp.concatenate([xm, xf, hm, hf, mk], axis=-1)
    assert feat.shape[1] == F

    # Tile rows: single grid step for small M, 512-row tiles at scale.
    Mp = _round_up(M, 8)
    tm = Mp if Mp <= 512 else 512
    Mp = _round_up(M, tm)

    feat = jnp.pad(feat, ((0, Mp - M), (0, Fp - F)))
    h_pad = jnp.pad(hf, ((0, Mp - M), (0, Hp - H)))

    out = meta_gru_pallas(feat.astype(matmul_dtype), h_pad, W_all, b_all, tm=tm)
    return out[:M, :H].reshape(B, N, H)


# ------------------------- Parameters / wrapper glue -------------------------

class MetaGRUCellPallas:
    GATES = ("r_x", "r_h", "z_x", "z_h", "c_x", "c_h")

    def __init__(self, meta_dim, input_dim, hidden_dim, key,
                 matmul_dtype=jnp.float32):
        # matmul_dtype=jnp.bfloat16 is the recommended choice on v6e/v7x
        # (f32 accumulation is kept via preferred_element_type); default f32
        # keeps v5e-friendly numerics and a tight reference tolerance.
        self.meta_dim = meta_dim
        self.input_dim = input_dim
        self.hidden_dim = hidden_dim
        self.matmul_dtype = matmul_dtype

        in_dims = dict(r_x=input_dim, r_h=hidden_dim, z_x=input_dim,
                       z_h=hidden_dim, c_x=input_dim, c_h=hidden_dim)
        self.in_dims = in_dims
        keys = jax.random.split(key, len(self.GATES))
        self.params = {n: self._init_meta_linear(k, in_dims[n])
                       for n, k in zip(self.GATES, keys)}
        self._build_fused()

    # --- per-MetaLinear parameters (mirrors nn.Linear(meta_dim, ...) init) ---
    def _init_meta_linear(self, key, in_dim):
        K, H = self.meta_dim, self.hidden_dim
        k1, k2, k3, k4 = jax.random.split(key, 4)
        s = float(K) ** -0.5
        return dict(
            Ww=jax.random.uniform(k1, (in_dim * H, K), jnp.float32, -s, s),
            bw=jax.random.uniform(k2, (in_dim * H,), jnp.float32, -s, s),
            Wb=jax.random.uniform(k3, (H, K), jnp.float32, -s, s),
            bb=jax.random.uniform(k4, (H,), jnp.float32, -s, s),
        )

    def _gate_blocks(self, name):
        """Fused-weight row blocks for one MetaLinear: (bilinear, raw-v, raw-mk, const)."""
        p = self.params[name]
        D, K, H = self.in_dims[name], self.meta_dim, self.hidden_dim
        # T[i*K + k, j] = Ww[i*H + j, k]  (matches feat layout v_i*mk_k, i-major)
        T = p["Ww"].reshape(D, H, K).transpose(0, 2, 1).reshape(D * K, H)
        Bv = p["bw"].reshape(D, H)      # multiplies raw v features
        Bm = p["Wb"].T                  # (K, H): multiplies raw mk features
        return T, Bv, Bm, p["bb"]

    def _build_fused(self):
        I, H, K = self.input_dim, self.hidden_dim, self.meta_dim
        Hp = _round_up(H, 128)                     # lane-dense gate blocks / output
        F = I * K + I + H * K + H + K
        Fp = _round_up(F, 128)                     # lane-dense feature loads
        self.Hp, self.F, self.Fp = Hp, F, Fp

        # feature row offsets inside feat = [x(x)mk | x | h(x)mk | h | mk]
        o_xm, o_x = 0, I * K
        o_hm, o_h = I * K + I, I * K + I + H * K
        o_mk = I * K + I + H * K + H

        W = jnp.zeros((Fp, 4 * Hp), jnp.float32)
        b = jnp.zeros((1, 4 * Hp), jnp.float32)

        def put(col_block, row_off, mat):
            nonlocal W
            c0 = col_block * Hp
            W = W.at[row_off:row_off + mat.shape[0], c0:c0 + H].add(mat)

        # r and z gates: x-side and h-side contributions summed in one column
        # block; their biases are pre-summed as well.
        for blk, (nx, nh) in enumerate((("r_x", "r_h"), ("z_x", "z_h"))):
            Tx, Bvx, Bmx, bbx = self._gate_blocks(nx)
            Th, Bvh, Bmh, bbh = self._gate_blocks(nh)
            put(blk, o_xm, Tx)
            put(blk, o_x, Bvx)
            put(blk, o_hm, Th)
            put(blk, o_h, Bvh)
            put(blk, o_mk, Bmx + Bmh)
            b = b.at[0, blk * Hp:blk * Hp + H].set(bbx + bbh)

        # candidate gate: x-side (block 2) and h-side (block 3) kept separate
        # because c = tanh(c_x + r * c_h).
        Tx, Bvx, Bmx, bbx = self._gate_blocks("c_x")
        put(2, o_xm, Tx)
        put(2, o_x, Bvx)
        put(2, o_mk, Bmx)
        b = b.at[0, 2 * Hp:2 * Hp + H].set(bbx)

        Th, Bvh, Bmh, bbh = self._gate_blocks("c_h")
        put(3, o_hm, Th)
        put(3, o_h, Bvh)
        put(3, o_mk, Bmh)
        b = b.at[0, 3 * Hp:3 * Hp + H].set(bbh)

        self.W_all = W.astype(self.matmul_dtype)
        self.b_all = b                                # bias stays f32

    # ------------------------------- forward --------------------------------
    def __call__(self, meta_knowledge, x, hidden):
        return meta_gru_forward(meta_knowledge, x, hidden,
                                self.W_all, self.b_all,
                                matmul_dtype=self.matmul_dtype)

    # ----------------- pure-JAX reference (mirrors PyTorch) -----------------
    def reference(self, meta_knowledge, x, hidden):
        B, N, I = x.shape
        H, K = self.hidden_dim, self.meta_dim
        M = B * N
        mk = meta_knowledge.reshape(M, K)
        xf = x.reshape(M, I)
        hf = hidden.reshape(M, H)

        def meta_linear(name, v):
            p = self.params[name]
            D = self.in_dims[name]
            w = (mk @ p["Ww"].T + p["bw"]).reshape(M, D, H)   # per-token weight
            b = mk @ p["Wb"].T + p["bb"]                      # per-token bias
            return jnp.einsum("md,mdh->mh", v, w) + b

        r = jax.nn.sigmoid(meta_linear("r_x", xf) + meta_linear("r_h", hf))
        z = jax.nn.sigmoid(meta_linear("z_x", xf) + meta_linear("z_h", hf))
        c = jnp.tanh(meta_linear("c_x", xf) + r * meta_linear("c_h", hf))
        out = (1.0 - z) * c + z * hf
        return out.reshape(B, N, H)


# --------------------------------- main -------------------------------------

if __name__ == "__main__":
    key = jax.random.PRNGKey(0)
    k_param, k_mk, k_x, k_h = jax.random.split(key, 4)

    batch, node_num = 2, 8
    meta_dim, input_dim, hidden_dim = 8, 16, 32

    cell = MetaGRUCellPallas(meta_dim, input_dim, hidden_dim, k_param)

    meta_knowledge = jax.random.normal(k_mk, (batch, node_num, meta_dim), jnp.float32)
    x = jax.random.normal(k_x, (batch, node_num, input_dim), jnp.float32)
    hidden = jax.random.normal(k_h, (batch, node_num, hidden_dim), jnp.float32)

    next_hidden = cell(meta_knowledge, x, hidden)
    next_hidden = jax.block_until_ready(next_hidden)

    ref = cell.reference(meta_knowledge, x, hidden)
    assert next_hidden.shape == (batch, node_num, hidden_dim)
    err = float(jnp.max(jnp.abs(next_hidden - ref)))
    assert jnp.allclose(next_hidden, ref, atol=1e-4, rtol=1e-4), err

    print("KERNEL_OK")
</pallas_src>

<mosaic_0001>
module attributes {stable_mosaic.version = 11 : i64} {
  func.func @meta_gru_kernel(%arg0: i32, %arg1: memref<16x512xf32, #tpu.memory_space<vmem>>, %arg2: memref<16x128xf32, #tpu.memory_space<vmem>>, %arg3: memref<512x512xf32, #tpu.memory_space<vmem>>, %arg4: memref<1x512xf32, #tpu.memory_space<vmem>>, %arg5: memref<16x128xf32, #tpu.memory_space<vmem>>) attributes {dimension_semantics = [#tpu.dimension_semantics<parallel>], iteration_bounds = array<i64: 1>, scalar_prefetch = 0 : i64, scratch_operands = 0 : i64, tpu.core_type = #tpu.core_type<tc>, window_params = [{transform_indices = @transform_0, window_bounds = array<i64: 16, 512>}, {transform_indices = @transform_1, window_bounds = array<i64: 16, 128>}, {pipeline_mode = #tpu.pipeline_mode<synchronous>, transform_indices = @transform_2, window_bounds = array<i64: 512, 512>}, {pipeline_mode = #tpu.pipeline_mode<synchronous>, transform_indices = @transform_3, window_bounds = array<i64: 1, 512>}, {transform_indices = @transform_4, window_bounds = array<i64: 16, 128>}]} {
    %c0 = arith.constant 0 : index
    %c0_0 = arith.constant 0 : index
    %0 = vector.load %arg1[%c0, %c0_0] : memref<16x512xf32, #tpu.memory_space<vmem>>, vector<16x512xf32>
    %c0_1 = arith.constant 0 : index
    %c0_2 = arith.constant 0 : index
    %1 = vector.load %arg3[%c0_1, %c0_2] : memref<512x512xf32, #tpu.memory_space<vmem>>, vector<512x512xf32>
    %cst = arith.constant dense<0.000000e+00> : vector<16x512xf32>
    %2 = tpu.matmul %0, %1, %cst {dimension_numbers = #tpu.dot_dimension_numbers<[1], [0], [0], [1], [0, 0, 1, 1], [], []>} : vector<16x512xf32>, vector<512x512xf32>, vector<16x512xf32> -> vector<16x512xf32>
    %c0_3 = arith.constant 0 : index
    %c0_4 = arith.constant 0 : index
    %3 = vector.load %arg4[%c0_3, %c0_4] : memref<1x512xf32, #tpu.memory_space<vmem>>, vector<1x512xf32>
    %4 = vector.broadcast %3 : vector<1x512xf32> to vector<16x512xf32>
    %5 = arith.addf %2, %4 : vector<16x512xf32>
    %6 = vector.extract_strided_slice %5 {offsets = [0, 0], sizes = [16, 256], strides = [1, 1]} : vector<16x512xf32> to vector<16x256xf32>
    %7 = arith.negf %6 : vector<16x256xf32>
    %8 = math.exp %7 : vector<16x256xf32>
    %cst_5 = arith.constant 1.000000e+00 : f32
    %9 = vector.broadcast %cst_5 : f32 to vector<16x256xf32>
    %10 = arith.addf %9, %8 : vector<16x256xf32>
    %11 = arith.divf %9, %10 : vector<16x256xf32>
    %12 = vector.extract_strided_slice %11 {offsets = [0, 0], sizes = [16, 128], strides = [1, 1]} : vector<16x256xf32> to vector<16x128xf32>
    %13 = vector.extract_strided_slice %11 {offsets = [0, 128], sizes = [16, 128], strides = [1, 1]} : vector<16x256xf32> to vector<16x128xf32>
    %14 = vector.extract_strided_slice %5 {offsets = [0, 256], sizes = [16, 128], strides = [1, 1]} : vector<16x512xf32> to vector<16x128xf32>
    %15 = vector.extract_strided_slice %5 {offsets = [0, 384], sizes = [16, 128], strides = [1, 1]} : vector<16x512xf32> to vector<16x128xf32>
    %16 = arith.mulf %12, %15 : vector<16x128xf32>
    %17 = arith.addf %14, %16 : vector<16x128xf32>
    %18 = math.tanh %17 : vector<16x128xf32>
    %c0_6 = arith.constant 0 : index
    %c0_7 = arith.constant 0 : index
    %19 = vector.load %arg2[%c0_6, %c0_7] : memref<16x128xf32, #tpu.memory_space<vmem>>, vector<16x128xf32>
    %20 = arith.subf %19, %18 : vector<16x128xf32>
    %21 = arith.mulf %13, %20 : vector<16x128xf32>
    %22 = arith.addf %18, %21 : vector<16x128xf32>
    %c0_8 = arith.constant 0 : index
    %c0_9 = arith.constant 0 : index
    %23 = vector.load %arg5[%c0_8, %c0_9] : memref<16x128xf32, #tpu.memory_space<vmem>>, vector<16x128xf32>
    tpu.vector_store %arg5[%c0_8, %c0_9], %22 {strides = array<i32>} : memref<16x128xf32, #tpu.memory_space<vmem>>, vector<16x128xf32>,
    return
  }
  func.func @transform_0(%arg0: i32) -> (i32, i32) {
    %c0_i32 = arith.constant 0 : i32
    %c0_i32_0 = arith.constant 0 : i32
    return %arg0, %c0_i32 : i32, i32
  }
  func.func @transform_1(%arg0: i32) -> (i32, i32) {
    %c0_i32 = arith.constant 0 : i32
    %c0_i32_0 = arith.constant 0 : i32
    return %arg0, %c0_i32 : i32, i32
  }
  func.func @transform_2(%arg0: i32) -> (i32, i32) {
    %c0_i32 = arith.constant 0 : i32
    %c0_i32_0 = arith.constant 0 : i32
    %c0_i32_1 = arith.constant 0 : i32
    return %c0_i32, %c0_i32_0 : i32, i32
  }
  func.func @transform_3(%arg0: i32) -> (i32, i32) {
    %c0_i32 = arith.constant 0 : i32
    %c0_i32_0 = arith.constant 0 : i32
    %c0_i32_1 = arith.constant 0 : i32
    return %c0_i32, %c0_i32_0 : i32, i32
  }
  func.func @transform_4(%arg0: i32) -> (i32, i32) {
    %c0_i32 = arith.constant 0 : i32
    %c0_i32_0 = arith.constant 0 : i32
    return %arg0, %c0_i32 : i32, i32
  }
}

</mosaic_0001>

<llo_original>
// kernel: meta_gru_forward.1
$region0: #{meta_gru_forward.1}
  #allocation0 [shape = 'u32[]', space=smem, size = 0x4, offset = 0x4, fixed_abs, tag = 'smem constant byte address 0x4 - core index']
  #allocation1 [shape = 'u32[144,128]{1,0:T(1,128)}', space=vmem, size = 0x12000, scoped, tag = 'internal scratch']
  %s0 = inlined_call_operand.vmem [shape: f32[16,512], index: 0, kind: input, shape index: {}]
  %s1 = inlined_call_operand.vmem [shape: f32[16,128], index: 1, kind: input, shape index: {}]
  %s2 = inlined_call_operand.hbm [shape: f32[512,512], index: 2, kind: input, shape index: {}]
  %s3 = inlined_call_operand.vmem [shape: f32[1,512], index: 3, kind: input, shape index: {}]
  %s4 = inlined_call_operand.vmem [shape: f32[16,128], index: 4, kind: output, shape index: {}]
  %s5 = sld [smem:[#allocation0]]
  $region30: #{meta_gru_forward.1} parent=0
    _
  %s7 = ssub.s32 1, %s5
  %s8 = scalar_select 0, %s7, %s5
  $region1: #{meta_gru_forward.1} parent=0
    #allocation2 [shape = 'u8[1048576]{0}', space=vmem, size = 0x100000, scoped, tag = 'input window, operand 2, single buffered']
    #allocation3 [shape = 's32[1]{0}', space=sflag, size = 0x4, scoped, tag = 'scoped memory for meta_gru_forward.1']
    %9 = vsyncpa [#allocation3], 0
    // Predicated region
    $region2: #{meta_gru_forward.1} parent=1 // pred_check
      _
    $region3: #{meta_gru_forward.1} parent=1 // pred_check_branch
      %11 = sbr.rel (0) target = $region5
    $region4: #{meta_gru_forward.1} parent=1 // pred_region
      _
    $region5: #{meta_gru_forward.1} parent=1 // pred_fallthru
      _
    // Predicated region
    $region6: #{meta_gru_forward.1} parent=1 // pred_check
      _
    $region7: #{meta_gru_forward.1} parent=1 // pred_check_branch
      %13 = sbr.rel (0) target = $region9
    $region8: #{meta_gru_forward.1} parent=1 // pred_region
      _
    $region9: #{meta_gru_forward.1} parent=1 // pred_fallthru
      _
    // Predicated region
    $region10: #{meta_gru_forward.1} parent=1 // pred_check
      _
    $region11: #{meta_gru_forward.1} parent=1 // pred_check_branch
      %15 = sbr.rel (0) target = $region13
    $region12: #{meta_gru_forward.1} parent=1 // pred_region
      %s17 = ssub.s32 32768, 32768
      %18 = vsyncadd [#allocation3], %s17
      %s19 = sshll.u32 [#allocation2], 4
      %s20 = int_to_ptr.vmem [resolvable:$true] %s19
      %25 = dma.hbm_to_vmem [thread:$0]  %s2, 32768, %s20, [#allocation3], 512, 512, 32
    $region13: #{meta_gru_forward.1} parent=1 // pred_fallthru
      _
    // Predicated region
    $region14: #{meta_gru_forward.1} parent=1 // pred_check
      _
    $region15: #{meta_gru_forward.1} parent=1 // pred_check_branch
      %27 = sbr.rel (0) target = $region17
    $region16: #{meta_gru_forward.1} parent=1 // pred_region
      _
    $region17: #{meta_gru_forward.1} parent=1 // pred_fallthru
      _
    // Predicated region
    $region18: #{meta_gru_forward.1} parent=1 // pred_check
      _
    $region19: #{meta_gru_forward.1} parent=1 // pred_check_branch
      %29 = sbr.rel (0) target = $region21
    $region20: #{meta_gru_forward.1} parent=1 // pred_region
      %30 = dma.done [#allocation3], 32768
    $region21: #{meta_gru_forward.1} parent=1 // pred_fallthru
      _
    %v31 = vld [vmem:[%s0] sm:$0xff]
    %v32 = vld [vmem:[%s0 + $0x8] sm:$0xff]
    %v33 = vld [vmem:[%s0 + $0x10] sm:$0xff]
    %v34 = vld [vmem:[%s0 + $0x18] sm:$0xff]
    %v35 = vld [vmem:[%s0 + $0x20] sm:$0xff]
    %v36 = vld [vmem:[%s0 + $0x28] sm:$0xff]
    %v37 = vld [vmem:[%s0 + $0x30] sm:$0xff]
    %v38 = vld [vmem:[%s0 + $0x38] sm:$0xff]
    %v39 = vld [vmem:[#allocation2] sm:$0xff]
    %v40 = vld [vmem:[#allocation2 + $0x8] sm:$0xff]
    %v41 = vld [vmem:[#allocation2 + $0x10] sm:$0xff]
    %v42 = vld [vmem:[#allocation2 + $0x18] sm:$0xff]
    %v43 = vld [vmem:[#allocation2 + $0x20] sm:$0xff]
    %v44 = vld [vmem:[#allocation2 + $0x28] sm:$0xff]
    %v45 = vld [vmem:[#allocation2 + $0x30] sm:$0xff]
    %v46 = vld [vmem:[#allocation2 + $0x38] sm:$0xff]
    %v47 = vld [vmem:[#allocation2 + $0x40] sm:$0xff]
    %v48 = vld [vmem:[#allocation2 + $0x48] sm:$0xff]
    %v49 = vld [vmem:[#allocation2 + $0x50] sm:$0xff]
    %v50 = vld [vmem:[#allocation2 + $0x58] sm:$0xff]
    %v51 = vld [vmem:[#allocation2 + $0x60] sm:$0xff]
    %v52 = vld [vmem:[#allocation2 + $0x68] sm:$0xff]
    %v53 = vld [vmem:[#allocation2 + $0x70] sm:$0xff]
    %v54 = vld [vmem:[#allocation2 + $0x78] sm:$0xff]
    %v55 = vld [vmem:[#allocation2 + $0x80] sm:$0xff]
    %v56 = vld [vmem:[#allocation2 + $0x88] sm:$0xff]
    %v57 = vld [vmem:[#allocation2 + $0x90] sm:$0xff]
    %v58 = vld [vmem:[#allocation2 + $0x98] sm:$0xff]
    %v59 = vld [vmem:[#allocation2 + $0xa0] sm:$0xff]
    %v60 = vld [vmem:[#allocation2 + $0xa8] sm:$0xff]
    %v61 = vld [vmem:[#allocation2 + $0xb0] sm:$0xff]
    %v62 = vld [vmem:[#allocation2 + $0xb8] sm:$0xff]
    %v63 = vld [vmem:[#allocation2 + $0xc0] sm:$0xff]
    %v64 = vld [vmem:[#allocation2 + $0xc8] sm:$0xff]
    %v65 = vld [vmem:[#allocation2 + $0xd0] sm:$0xff]
    %v66 = vld [vmem:[#allocation2 + $0xd8] sm:$0xff]
    %v67 = vld [vmem:[#allocation2 + $0xe0] sm:$0xff]
    %v68 = vld [vmem:[#allocation2 + $0xe8] sm:$0xff]
    %v69 = vld [vmem:[#allocation2 + $0xf0] sm:$0xff]
    %v70 = vld [vmem:[#allocation2 + $0xf8] sm:$0xff]
    %v71 = vld [vmem:[#allocation2 + $0x100] sm:$0xff]
    %v72 = vld [vmem:[#allocation2 + $0x108] sm:$0xff]
    %v73 = vld [vmem:[#allocation2 + $0x110] sm:$0xff]
    %v74 = vld [vmem:[#allocation2 + $0x118] sm:$0xff]
    %v75 = vld [vmem:[#allocation2 + $0x120] sm:$0xff]
    %v76 = vld [vmem:[#allocation2 + $0x128] sm:$0xff]
    %v77 = vld [vmem:[#allocation2 + $0x130] sm:$0xff]
    %v78 = vld [vmem:[#allocation2 + $0x138] sm:$0xff]
    %v79 = vld [vmem:[#allocation2 + $0x140] sm:$0xff]
    %v80 = vld [vmem:[#allocation2 + $0x148] sm:$0xff]
    %v81 = vld [vmem:[#allocation2 + $0x150] sm:$0xff]
    %v82 = vld [vmem:[#allocation2 + $0x158] sm:$0xff]
    %v83 = vld [vmem:[#allocation2 + $0x160] sm:$0xff]
    %v84 = vld [vmem:[#allocation2 + $0x168] sm:$0xff]
    %v85 = vld [vmem:[#allocation2 + $0x170] sm:$0xff]
    %v86 = vld [vmem:[#allocation2 + $0x178] sm:$0xff]
    %v87 = vld [vmem:[#allocation2 + $0x180] sm:$0xff]
    %v88 = vld [vmem:[#allocation2 + $0x188] sm:$0xff]
    %v89 = vld [vmem:[#allocation2 + $0x190] sm:$0xff]
    %v90 = vld [vmem:[#allocation2 + $0x198] sm:$0xff]
    %v91 = vld [vmem:[#allocation2 + $0x1a0] sm:$0xff]
    %v92 = vld [vmem:[#allocation2 + $0x1a8] sm:$0xff]
    %v93 = vld [vmem:[#allocation2 + $0x1b0] sm:$0xff]
    %v94 = vld [vmem:[#allocation2 + $0x1b8] sm:$0xff]
    %v95 = vld [vmem:[#allocation2 + $0x1c0] sm:$0xff]
    %v96 = vld [vmem:[#allocation2 + $0x1c8] sm:$0xff]
    %v97 = vld [vmem:[#allocation2 + $0x1d0] sm:$0xff]
    %v98 = vld [vmem:[#allocation2 + $0x1d8] sm:$0xff]
    %v99 = vld [vmem:[#allocation2 + $0x1e0] sm:$0xff]
    %v100 = vld [vmem:[#allocation2 + $0x1e8] sm:$0xff]
    %v101 = vld [vmem:[#allocation2 + $0x1f0] sm:$0xff]
    %v102 = vld [vmem:[#allocation2 + $0x1f8] sm:$0xff]
    %v103 = vld [vmem:[#allocation2 + $0x200] sm:$0xff]
    %v104 = vld [vmem:[#allocation2 + $0x208] sm:$0xff]
    %v105 = vld [vmem:[#allocation2 + $0x210] sm:$0xff]
    %v106 = vld [vmem:[#allocation2 + $0x218] sm:$0xff]
    %v107 = vld [vmem:[#allocation2 + $0x220] sm:$0xff]
    %v108 = vld [vmem:[#allocation2 + $0x228] sm:$0xff]
    %v109 = vld [vmem:[#allocation2 + $0x230] sm:$0xff]
    %v110 = vld [vmem:[#allocation2 + $0x238] sm:$0xff]
    %v111 = vld [vmem:[#allocation2 + $0x240] sm:$0xff]
    %v112 = vld [vmem:[#allocation2 + $0x248] sm:$0xff]
    %v113 = vld [vmem:[#allocation2 + $0x250] sm:$0xff]
    %v114 = vld [vmem:[#allocation2 + $0x258] sm:$0xff]
    %v115 = vld [vmem:[#allocation2 + $0x260] sm:$0xff]
    %v116 = vld [vmem:[#allocation2 + $0x268] sm:$0xff]
    %v117 = vld [vmem:[#allocation2 + $0x270] sm:$0xff]
    %v118 = vld [vmem:[#allocation2 + $0x278] sm:$0xff]
    %v119 = vld [vmem:[#allocation2 + $0x280] sm:$0xff]
    %v120 = vld [vmem:[#allocation2 + $0x288] sm:$0xff]
    %v121 = vld [vmem:[#allocation2 + $0x290] sm:$0xff]
    %v122 = vld [vmem:[#allocation2 + $0x298] sm:$0xff]
    %v123 = vld [vmem:[#allocation2 + $0x2a0] sm:$0xff]
    %v124 = vld [vmem:[#allocation2 + $0x2a8] sm:$0xff]
    %v125 = vld [vmem:[#allocation2 + $0x2b0] sm:$0xff]
    %v126 = vld [vmem:[#allocation2 + $0x2b8] sm:$0xff]
    %v127 = vld [vmem:[#allocation2 + $0x2c0] sm:$0xff]
    %v128 = vld [vmem:[#allocation2 + $0x2c8] sm:$0xff]
    %v129 = vld [vmem:[#allocation2 + $0x2d0] sm:$0xff]
    %v130 = vld [vmem:[#allocation2 + $0x2d8] sm:$0xff]
    %v131 = vld [vmem:[#allocation2 + $0x2e0] sm:$0xff]
    %v132 = vld [vmem:[#allocation2 + $0x2e8] sm:$0xff]
    %v133 = vld [vmem:[#allocation2 + $0x2f0] sm:$0xff]
    %v134 = vld [vmem:[#allocation2 + $0x2f8] sm:$0xff]
    %v135 = vld [vmem:[#allocation2 + $0x300] sm:$0xff]
    %v136 = vld [vmem:[#allocation2 + $0x308] sm:$0xff]
    %v137 = vld [vmem:[#allocation2 + $0x310] sm:$0xff]
    %v138 = vld [vmem:[#allocation2 + $0x318] sm:$0xff]
    %v139 = vld [vmem:[#allocation2 + $0x320] sm:$0xff]
    %v140 = vld [vmem:[#allocation2 + $0x328] sm:$0xff]
    %v141 = vld [vmem:[#allocation2 + $0x330] sm:$0xff]
    %v142 = vld [vmem:[#allocation2 + $0x338] sm:$0xff]
    %v143 = vld [vmem:[#allocation2 + $0x340] sm:$0xff]
    %v144 = vld [vmem:[#allocation2 + $0x348] sm:$0xff]
    %v145 = vld [vmem:[#allocation2 + $0x350] sm:$0xff]
    %v146 = vld [vmem:[#allocation2 + $0x358] sm:$0xff]
    %v147 = vld [vmem:[#allocation2 + $0x360] sm:$0xff]
    %v148 = vld [vmem:[#allocation2 + $0x368] sm:$0xff]
    %v149 = vld [vmem:[#allocation2 + $0x370] sm:$0xff]
    %v150 = vld [vmem:[#allocation2 + $0x378] sm:$0xff]
    %v151 = vld [vmem:[#allocation2 + $0x380] sm:$0xff]
    %v152 = vld [vmem:[#allocation2 + $0x388] sm:$0xff]
    %v153 = vld [vmem:[#allocation2 + $0x390] sm:$0xff]
    %v154 = vld [vmem:[#allocation2 + $0x398] sm:$0xff]
    %v155 = vld [vmem:[#allocation2 + $0x3a0] sm:$0xff]
    %v156 = vld [vmem:[#allocation2 + $0x3a8] sm:$0xff]
    %v157 = vld [vmem:[#allocation2 + $0x3b0] sm:$0xff]
    %v158 = vld [vmem:[#allocation2 + $0x3b8] sm:$0xff]
    %v159 = vld [vmem:[#allocation2 + $0x3c0] sm:$0xff]
    %v160 = vld [vmem:[#allocation2 + $0x3c8] sm:$0xff]
    %v161 = vld [vmem:[#allocation2 + $0x3d0] sm:$0xff]
    %v162 = vld [vmem:[#allocation2 + $0x3d8] sm:$0xff]
    %v163 = vld [vmem:[#allocation2 + $0x3e0] sm:$0xff]
    %v164 = vld [vmem:[#allocation2 + $0x3e8] sm:$0xff]
    %v165 = vld [vmem:[#allocation2 + $0x3f0] sm:$0xff]
    %v166 = vld [vmem:[#allocation2 + $0x3f8] sm:$0xff]
    %v167 = vld [vmem:[#allocation2 + $0x400] sm:$0xff]
    %v168 = vld [vmem:[#allocation2 + $0x408] sm:$0xff]
    %v169 = vld [vmem:[#allocation2 + $0x410] sm:$0xff]
    %v170 = vld [vmem:[#allocation2 + $0x418] sm:$0xff]
    %v171 = vld [vmem:[#allocation2 + $0x420] sm:$0xff]
    %v172 = vld [vmem:[#allocation2 + $0x428] sm:$0xff]
    %v173 = vld [vmem:[#allocation2 + $0x430] sm:$0xff]
    %v174 = vld [vmem:[#allocation2 + $0x438] sm:$0xff]
    %v175 = vld [vmem:[#allocation2 + $0x440] sm:$0xff]
    %v176 = vld [vmem:[#allocation2 + $0x448] sm:$0xff]
    %v177 = vld [vmem:[#allocation2 + $0x450] sm:$0xff]
    %v178 = vld [vmem:[#allocation2 + $0x458] sm:$0xff]
    %v179 = vld [vmem:[#allocation2 + $0x460] sm:$0xff]
    %v180 = vld [vmem:[#allocation2 + $0x468] sm:$0xff]
    %v181 = vld [vmem:[#allocation2 + $0x470] sm:$0xff]
    %v182 = vld [vmem:[#allocation2 + $0x478] sm:$0xff]
    %v183 = vld [vmem:[#allocation2 + $0x480] sm:$0xff]
    %v184 = vld [vmem:[#allocation2 + $0x488] sm:$0xff]
    %v185 = vld [vmem:[#allocation2 + $0x490] sm:$0xff]
    %v186 = vld [vmem:[#allocation2 + $0x498] sm:$0xff]
    %v187 = vld [vmem:[#allocation2 + $0x4a0] sm:$0xff]
    %v188 = vld [vmem:[#allocation2 + $0x4a8] sm:$0xff]
    %v189 = vld [vmem:[#allocation2 + $0x4b0] sm:$0xff]
    %v190 = vld [vmem:[#allocation2 + $0x4b8] sm:$0xff]
    %v191 = vld [vmem:[#allocation2 + $0x4c0] sm:$0xff]
    %v192 = vld [vmem:[#allocation2 + $0x4c8] sm:$0xff]
    %v193 = vld [vmem:[#allocation2 + $0x4d0] sm:$0xff]
    %v194 = vld [vmem:[#allocation2 + $0x4d8] sm:$0xff]
    %v195 = vld [vmem:[#allocation2 + $0x4e0] sm:$0xff]
    %v196 = vld [vmem:[#allocation2 + $0x4e8] sm:$0xff]
    %v197 = vld [vmem:[#allocation2 + $0x4f0] sm:$0xff]
    %v198 = vld [vmem:[#allocation2 + $0x4f8] sm:$0xff]
    %v199 = vld [vmem:[#allocation2 + $0x500] sm:$0xff]
    %v200 = vld [vmem:[#allocation2 + $0x508] sm:$0xff]
    %v201 = vld [vmem:[#allocation2 + $0x510] sm:$0xff]
    %v202 = vld [vmem:[#allocation2 + $0x518] sm:$0xff]
    %v203 = vld [vmem:[#allocation2 + $0x520] sm:$0xff]
    %v204 = vld [vmem:[#allocation2 + $0x528] sm:$0xff]
    %v205 = vld [vmem:[#allocation2 + $0x530] sm:$0xff]
    %v206 = vld [vmem:[#allocation2 + $0x538] sm:$0xff]
    %v207 = vld [vmem:[#allocation2 + $0x540] sm:$0xff]
    %v208 = vld [vmem:[#allocation2 + $0x548] sm:$0xff]
    %v209 = vld [vmem:[#allocation2 + $0x550] sm:$0xff]
    %v210 = vld [vmem:[#allocation2 + $0x558] sm:$0xff]
    %v211 = vld [vmem:[#allocation2 + $0x560] sm:$0xff]
    %v212 = vld [vmem:[#allocation2 + $0x568] sm:$0xff]
    %v213 = vld [vmem:[#allocation2 + $0x570] sm:$0xff]
    %v214 = vld [vmem:[#allocation2 + $0x578] sm:$0xff]
    %v215 = vld [vmem:[#allocation2 + $0x580] sm:$0xff]
    %v216 = vld [vmem:[#allocation2 + $0x588] sm:$0xff]
    %v217 = vld [vmem:[#allocation2 + $0x590] sm:$0xff]
    %v218 = vld [vmem:[#allocation2 + $0x598] sm:$0xff]
    %v219 = vld [vmem:[#allocation2 + $0x5a0] sm:$0xff]
    %v220 = vld [vmem:[#allocation2 + $0x5a8] sm:$0xff]
    %v221 = vld [vmem:[#allocation2 + $0x5b0] sm:$0xff]
    %v222 = vld [vmem:[#allocation2 + $0x5b8] sm:$0xff]
    %v223 = vld [vmem:[#allocation2 + $0x5c0] sm:$0xff]
    %v224 = vld [vmem:[#allocation2 + $0x5c8] sm:$0xff]
    %v225 = vld [vmem:[#allocation2 + $0x5d0] sm:$0xff]
    %v226 = vld [vmem:[#allocation2 + $0x5d8] sm:$0xff]
    %v227 = vld [vmem:[#allocation2 + $0x5e0] sm:$0xff]
    %v228 = vld [vmem:[#allocation2 + $0x5e8] sm:$0xff]
    %v229 = vld [vmem:[#allocation2 + $0x5f0] sm:$0xff]
    %v230 = vld [vmem:[#allocation2 + $0x5f8] sm:$0xff]
    %v231 = vld [vmem:[#allocation2 + $0x600] sm:$0xff]
    %v232 = vld [vmem:[#allocation2 + $0x608] sm:$0xff]
    %v233 = vld [vmem:[#allocation2 + $0x610] sm:$0xff]
    %v234 = vld [vmem:[#allocation2 + $0x618] sm:$0xff]
    %v235 = vld [vmem:[#allocation2 + $0x620] sm:$0xff]
    %v236 = vld [vmem:[#allocation2 + $0x628] sm:$0xff]
    %v237 = vld [vmem:[#allocation2 + $0x630] sm:$0xff]
    %v238 = vld [vmem:[#allocation2 + $0x638] sm:$0xff]
    %v239 = vld [vmem:[#allocation2 + $0x640] sm:$0xff]
    %v240 = vld [vmem:[#allocation2 + $0x648] sm:$0xff]
    %v241 = vld [vmem:[#allocation2 + $0x650] sm:$0xff]
    %v242 = vld [vmem:[#allocation2 + $0x658] sm:$0xff]
    %v243 = vld [vmem:[#allocation2 + $0x660] sm:$0xff]
    %v244 = vld [vmem:[#allocation2 + $0x668] sm:$0xff]
    %v245 = vld [vmem:[#allocation2 + $0x670] sm:$0xff]
    %v246 = vld [vmem:[#allocation2 + $0x678] sm:$0xff]
    %v247 = vld [vmem:[#allocation2 + $0x680] sm:$0xff]
    %v248 = vld [vmem:[#allocation2 + $0x688] sm:$0xff]
    %v249 = vld [vmem:[#allocation2 + $0x690] sm:$0xff]
    %v250 = vld [vmem:[#allocation2 + $0x698] sm:$0xff]
    %v251 = vld [vmem:[#allocation2 + $0x6a0] sm:$0xff]
    %v252 = vld [vmem:[#allocation2 + $0x6a8] sm:$0xff]
    %v253 = vld [vmem:[#allocation2 + $0x6b0] sm:$0xff]
    %v254 = vld [vmem:[#allocation2 + $0x6b8] sm:$0xff]
    %v255 = vld [vmem:[#allocation2 + $0x6c0] sm:$0xff]
    %v256 = vld [vmem:[#allocation2 + $0x6c8] sm:$0xff]
    %v257 = vld [vmem:[#allocation2 + $0x6d0] sm:$0xff]
    %v258 = vld [vmem:[#allocation2 + $0x6d8] sm:$0xff]
    %v259 = vld [vmem:[#allocation2 + $0x6e0] sm:$0xff]
    %v260 = vld [vmem:[#allocation2 + $0x6e8] sm:$0xff]
    %v261 = vld [vmem:[#allocation2 + $0x6f0] sm:$0xff]
    %v262 = vld [vmem:[#allocation2 + $0x6f8] sm:$0xff]
    %v263 = vld [vmem:[#allocation2 + $0x700] sm:$0xff]
    %v264 = vld [vmem:[#allocation2 + $0x708] sm:$0xff]
    %v265 = vld [vmem:[#allocation2 + $0x710] sm:$0xff]
    %v266 = vld [vmem:[#allocation2 + $0x718] sm:$0xff]
    %v267 = vld [vmem:[#allocation2 + $0x720] sm:$0xff]
    %v268 = vld [vmem:[#allocation2 + $0x728] sm:$0xff]
    %v269 = vld [vmem:[#allocation2 + $0x730] sm:$0xff]
    %v270 = vld [vmem:[#allocation2 + $0x738] sm:$0xff]
    %v271 = vld [vmem:[#allocation2 + $0x740] sm:$0xff]
    %v272 = vld [vmem:[#allocation2 + $0x748] sm:$0xff]
    %v273 = vld [vmem:[#allocation2 + $0x750] sm:$0xff]
    %v274 = vld [vmem:[#allocation2 + $0x758] sm:$0xff]
    %v275 = vld [vmem:[#allocation2 + $0x760] sm:$0xff]
    %v276 = vld [vmem:[#allocation2 + $0x768] sm:$0xff]
    %v277 = vld [vmem:[#allocation2 + $0x770] sm:$0xff]
    %v278 = vld [vmem:[#allocation2 + $0x778] sm:$0xff]
    %v279 = vld [vmem:[#allocation2 + $0x780] sm:$0xff]
    %v280 = vld [vmem:[#allocation2 + $0x788] sm:$0xff]
    %v281 = vld [vmem:[#allocation2 + $0x790] sm:$0xff]
    %v282 = vld [vmem:[#allocation2 + $0x798] sm:$0xff]
    %v283 = vld [vmem:[#allocation2 + $0x7a0] sm:$0xff]
    %v284 = vld [vmem:[#allocation2 + $0x7a8] sm:$0xff]
    %v285 = vld [vmem:[#allocation2 + $0x7b0] sm:$0xff]
    %v286 = vld [vmem:[#allocation2 + $0x7b8] sm:$0xff]
    %v287 = vld [vmem:[#allocation2 + $0x7c0] sm:$0xff]
    %v288 = vld [vmem:[#allocation2 + $0x7c8] sm:$0xff]
    %v289 = vld [vmem:[#allocation2 + $0x7d0] sm:$0xff]
    %v290 = vld [vmem:[#allocation2 + $0x7d8] sm:$0xff]
    %v291 = vld [vmem:[#allocation2 + $0x7e0] sm:$0xff]
    %v292 = vld [vmem:[#allocation2 + $0x7e8] sm:$0xff]
    %v293 = vld [vmem:[#allocation2 + $0x7f0] sm:$0xff]
    %v294 = vld [vmem:[#allocation2 + $0x7f8] sm:$0xff]
    %v295 = vld [vmem:[%s3] sm:$0xf]
    %v297 = vlaneseq
    %v298 = vshrl.u32 %v297, 7
    %v299 = vsub.s32 0, %v298
    %v300 = vrot.slane %v295, %v299
    %v301 = vlaneseq
    %v302 = vshrl.u32 %v301, 7
    %v303 = vsub.s32 1, %v302
    %v304 = vrot.slane %v295, %v303
    %v305 = vlaneseq
    %v306 = vshrl.u32 %v305, 7
    %v307 = vsub.s32 2, %v306
    %v308 = vrot.slane %v295, %v307
    %v309 = vlaneseq
    %v310 = vshrl.u32 %v309, 7
    %v311 = vsub.s32 3, %v310
    %v312 = vrot.slane %v295, %v311
    %317 = vmatprep.subr.mxu0 %v40
    %318 = vmatpush1.msra.mxu0 %v39
    %319 = vmatprep.subr.mxu0 %v44
    %320 = vmatpush1.msra.mxu0 %v43
    %321 = vmatprep.subr.mxu0 %v48
    %322 = vmatpush1.msra.mxu0 %v47
    %323 = vmatprep.subr.mxu0 %v52
    %324 = vmatpush1.msra.mxu0 %v51
    %325 = vmatprep.subr.mxu0 %v56
    %326 = vmatpush1.msra.mxu0 %v55
    %327 = vmatprep.subr.mxu0 %v60
    %328 = vmatpush1.msra.mxu0 %v59
    %329 = vmatprep.subr.mxu0 %v64
    %330 = vmatpush1.msra.mxu0 %v63
    %331 = vmatprep.subr.mxu0 %v68
    %332 = vmatpush1.msra.mxu0 %v67
    %333 = vmatprep.subr.mxu0 %v72
    %334 = vmatpush1.msra.mxu0 %v71
    %335 = vmatprep.subr.mxu0 %v76
    %336 = vmatpush1.msra.mxu0 %v75
    %337 = vmatprep.subr.mxu0 %v80
    %338 = vmatpush1.msra.mxu0 %v79
    %339 = vmatprep.subr.mxu0 %v84
    %340 = vmatpush1.msra.mxu0 %v83
    %341 = vmatprep.subr.mxu0 %v88
    %342 = vmatpush1.msra.mxu0 %v87
    %343 = vmatprep.subr.mxu0 %v92
    %344 = vmatpush1.msra.mxu0 %v91
    %345 = vmatprep.subr.mxu0 %v96
    %346 = vmatpush1.msra.mxu0 %v95
    %347 = vmatprep.subr.mxu0 %v100
    %348 = vmatpush1.msra.mxu0 %v99
    %349 = vmatprep.subr.mxu0 %v104
    %350 = vmatpush1.msra.mxu0 %v103
    %351 = vmatprep.subr.mxu0 %v108
    %352 = vmatpush1.msra.mxu0 %v107
    %353 = vmatprep.subr.mxu0 %v112
    %354 = vmatpush1.msra.mxu0 %v111
    %355 = vmatprep.subr.mxu0 %v116
    %356 = vmatpush1.msra.mxu0 %v115
    %357 = vmatprep.subr.mxu0 %v120
    %358 = vmatpush1.msra.mxu0 %v119
    %359 = vmatprep.subr.mxu0 %v124
    %360 = vmatpush1.msra.mxu0 %v123
    %361 = vmatprep.subr.mxu0 %v128
    %362 = vmatpush1.msra.mxu0 %v127
    %363 = vmatprep.subr.mxu0 %v132
    %364 = vmatpush1.msra.mxu0 %v131
    %365 = vmatprep.subr.mxu0 %v136
    %366 = vmatpush1.msra.mxu0 %v135
    %367 = vmatprep.subr.mxu0 %v140
    %368 = vmatpush1.msra.mxu0 %v139
    %369 = vmatprep.subr.mxu0 %v144
    %370 = vmatpush1.msra.mxu0 %v143
    %371 = vmatprep.subr.mxu0 %v148
    %372 = vmatpush1.msra.mxu0 %v147
    %373 = vmatprep.subr.mxu0 %v152
    %374 = vmatpush1.msra.mxu0 %v151
    %375 = vmatprep.subr.mxu0 %v156
    %376 = vmatpush1.msra.mxu0 %v155
    %377 = vmatprep.subr.mxu0 %v160
    %378 = vmatpush1.msra.mxu0 %v159
    %379 = vmatprep.subr.mxu0 %v164
    %380 = vmatpush1.msra.mxu0 %v163
    %381 = vmatprep.mubr.f32.mxu0 %v32
    %382 = vmatmul.mubr.f32.gmra.mrb[0].mxu0 %v31
    %v383 = vpop.f32.mrb[0].mxu0
    %v384 = vadd.f32 %v300, %v383
    %v385 = vpop.f32.mrb[0].mxu0
    %v386 = vadd.f32 %v304, %v385
    %387 = vmatprep.mubr.f32.mxu0 %v36
    %388 = vmatmul.mubr.f32.gmra.mrb[0].mxu0 %v35
    %v389 = vpop.f32.mrb[0].mxu0
    %v390 = vadd.f32 %v300, %v389
    %v391 = vpop.f32.mrb[0].mxu0
    %v392 = vadd.f32 %v304, %v391
    %393 = vdwg.mxu0
    %394 = vmatprep.subr.mxu0 %v168
    %395 = vmatpush1.msra.mxu0 %v167
    %396 = vmatprep.subr.mxu0 %v172
    %397 = vmatpush1.msra.mxu0 %v171
    %398 = vmatprep.subr.mxu0 %v176
    %399 = vmatpush1.msra.mxu0 %v175
    %400 = vmatprep.subr.mxu0 %v180
    %401 = vmatpush1.msra.mxu0 %v179
    %402 = vmatprep.subr.mxu0 %v184
    %403 = vmatpush1.msra.mxu0 %v183
    %404 = vmatprep.subr.mxu0 %v188
    %405 = vmatpush1.msra.mxu0 %v187
    %406 = vmatprep.subr.mxu0 %v192
    %407 = vmatpush1.msra.mxu0 %v191
    %408 = vmatprep.subr.mxu0 %v196
    %409 = vmatpush1.msra.mxu0 %v195
    %410 = vmatprep.subr.mxu0 %v200
    %411 = vmatpush1.msra.mxu0 %v199
    %412 = vmatprep.subr.mxu0 %v204
    %413 = vmatpush1.msra.mxu0 %v203
    %414 = vmatprep.subr.mxu0 %v208
    %415 = vmatpush1.msra.mxu0 %v207
    %416 = vmatprep.subr.mxu0 %v212
    %417 = vmatpush1.msra.mxu0 %v211
    %418 = vmatprep.subr.mxu0 %v216
    %419 = vmatpush1.msra.mxu0 %v215
    %420 = vmatprep.subr.mxu0 %v220
    %421 = vmatpush1.msra.mxu0 %v219
    %422 = vmatprep.subr.mxu0 %v224
    %423 = vmatpush1.msra.mxu0 %v223
    %424 = vmatprep.subr.mxu0 %v228
    %425 = vmatpush1.msra.mxu0 %v227
    %426 = vmatprep.subr.mxu0 %v232
    %427 = vmatpush1.msra.mxu0 %v231
    %428 = vmatprep.subr.mxu0 %v236
    %429 = vmatpush1.msra.mxu0 %v235
    %430 = vmatprep.subr.mxu0 %v240
    %431 = vmatpush1.msra.mxu0 %v239
    %432 = vmatprep.subr.mxu0 %v244
    %433 = vmatpush1.msra.mxu0 %v243
    %434 = vmatprep.subr.mxu0 %v248
    %435 = vmatpush1.msra.mxu0 %v247
    %436 = vmatprep.subr.mxu0 %v252
    %437 = vmatpush1.msra.mxu0 %v251
    %438 = vmatprep.subr.mxu0 %v256
    %439 = vmatpush1.msra.mxu0 %v255
    %440 = vmatprep.subr.mxu0 %v260
    %441 = vmatpush1.msra.mxu0 %v259
    %442 = vmatprep.subr.mxu0 %v264
    %443 = vmatpush1.msra.mxu0 %v263
    %444 = vmatprep.subr.mxu0 %v268
    %445 = vmatpush1.msra.mxu0 %v267
    %446 = vmatprep.subr.mxu0 %v272
    %447 = vmatpush1.msra.mxu0 %v271
    %448 = vmatprep.subr.mxu0 %v276
    %449 = vmatpush1.msra.mxu0 %v275
    %450 = vmatprep.subr.mxu0 %v280
    %451 = vmatpush1.msra.mxu0 %v279
    %452 = vmatprep.subr.mxu0 %v284
    %453 = vmatpush1.msra.mxu0 %v283
    %454 = vmatprep.subr.mxu0 %v288
    %455 = vmatpush1.msra.mxu0 %v287
    %456 = vmatprep.subr.mxu0 %v292
    %457 = vmatpush1.msra.mxu0 %v291
    %458 = vmatprep.mubr.f32.mxu0 %v34
    %459 = vmatmul.mubr.f32.gmra.mrb[0].mxu0 %v33
    %v460 = vpop.f32.mrb[0].mxu0
    %v461 = vadd.f32 %v384, %v460
    %v462 = vpop.f32.mrb[0].mxu0
    %v463 = vadd.f32 %v386, %v462
    %464 = vmatprep.mubr.f32.mxu0 %v38
    %465 = vmatmul.mubr.f32.gmra.mrb[0].mxu0 %v37
    %v466 = vpop.f32.mrb[0].mxu0
    %v467 = vadd.f32 %v390, %v466
    %v468 = vpop.f32.mrb[0].mxu0
    %v469 = vadd.f32 %v392, %v468
    %470 = vdwg.mxu0
    %471 = vmatprep.subr.mxu0 %v42
    %472 = vmatpush1.msra.mxu0 %v41
    %473 = vmatprep.subr.mxu0 %v46
    %474 = vmatpush1.msra.mxu0 %v45
    %475 = vmatprep.subr.mxu0 %v50
    %476 = vmatpush1.msra.mxu0 %v49
    %477 = vmatprep.subr.mxu0 %v54
    %478 = vmatpush1.msra.mxu0 %v53
    %479 = vmatprep.subr.mxu0 %v58
    %480 = vmatpush1.msra.mxu0 %v57
    %481 = vmatprep.subr.mxu0 %v62
    %482 = vmatpush1.msra.mxu0 %v61
    %483 = vmatprep.subr.mxu0 %v66
    %484 = vmatpush1.msra.mxu0 %v65
    %485 = vmatprep.subr.mxu0 %v70
    %486 = vmatpush1.msra.mxu0 %v69
    %487 = vmatprep.subr.mxu0 %v74
    %488 = vmatpush1.msra.mxu0 %v73
    %489 = vmatprep.subr.mxu0 %v78
    %490 = vmatpush1.msra.mxu0 %v77
    %491 = vmatprep.subr.mxu0 %v82
    %492 = vmatpush1.msra.mxu0 %v81
    %493 = vmatprep.subr.mxu0 %v86
    %494 = vmatpush1.msra.mxu0 %v85
    %495 = vmatprep.subr.mxu0 %v90
    %496 = vmatpush1.msra.mxu0 %v89
    %497 = vmatprep.subr.mxu0 %v94
    %498 = vmatpush1.msra.mxu0 %v93
    %499 = vmatprep.subr.mxu0 %v98
    %500 = vmatpush1.msra.mxu0 %v97
    %501 = vmatprep.subr.mxu0 %v102
    %502 = vmatpush1.msra.mxu0 %v101
    %503 = vmatprep.subr.mxu0 %v106
    %504 = vmatpush1.msra.mxu0 %v105
    %505 = vmatprep.subr.mxu0 %v110
    %506 = vmatpush1.msra.mxu0 %v109
    %507 = vmatprep.subr.mxu0 %v114
    %508 = vmatpush1.msra.mxu0 %v113
    %509 = vmatprep.subr.mxu0 %v118
    %510 = vmatpush1.msra.mxu0 %v117
    %511 = vmatprep.subr.mxu0 %v122
    %512 = vmatpush1.msra.mxu0 %v121
    %513 = vmatprep.subr.mxu0 %v126
    %514 = vmatpush1.msra.mxu0 %v125
    %515 = vmatprep.subr.mxu0 %v130
    %516 = vmatpush1.msra.mxu0 %v129
    %517 = vmatprep.subr.mxu0 %v134
    %518 = vmatpush1.msra.mxu0 %v133
    %519 = vmatprep.subr.mxu0 %v138
    %520 = vmatpush1.msra.mxu0 %v137
    %521 = vmatprep.subr.mxu0 %v142
    %522 = vmatpush1.msra.mxu0 %v141
    %523 = vmatprep.subr.mxu0 %v146
    %524 = vmatpush1.msra.mxu0 %v145
    %525 = vmatprep.subr.mxu0 %v150
    %526 = vmatpush1.msra.mxu0 %v149
    %527 = vmatprep.subr.mxu0 %v154
    %528 = vmatpush1.msra.mxu0 %v153
    %529 = vmatprep.subr.mxu0 %v158
    %530 = vmatpush1.msra.mxu0 %v157
    %531 = vmatprep.subr.mxu0 %v162
    %532 = vmatpush1.msra.mxu0 %v161
    %533 = vmatprep.subr.mxu0 %v166
    %534 = vmatpush1.msra.mxu0 %v165
    %535 = vmatprep.mubr.f32.mxu0 %v32
    %536 = vmatmul.mubr.f32.gmra.mrb[0].mxu0 %v31
    %v537 = vpop.f32.mrb[0].mxu0
    %v538 = vadd.f32 %v308, %v537
    %v539 = vpop.f32.mrb[0].mxu0
    %v540 = vadd.f32 %v312, %v539
    %541 = vmatprep.mubr.f32.mxu0 %v36
    %542 = vmatmul.mubr.f32.gmra.mrb[0].mxu0 %v35
    %v543 = vpop.f32.mrb[0].mxu0
    %v544 = vadd.f32 %v308, %v543
    %v545 = vpop.f32.mrb[0].mxu0
    %v546 = vadd.f32 %v312, %v545
    %547 = vdwg.mxu0
    %548 = vmatprep.subr.mxu0 %v170
    %549 = vmatpush1.msra.mxu0 %v169
    %550 = vmatprep.subr.mxu0 %v174
    %551 = vmatpush1.msra.mxu0 %v173
    %552 = vmatprep.subr.mxu0 %v178
    %553 = vmatpush1.msra.mxu0 %v177
    %554 = vmatprep.subr.mxu0 %v182
    %555 = vmatpush1.msra.mxu0 %v181
    %556 = vmatprep.subr.mxu0 %v186
    %557 = vmatpush1.msra.mxu0 %v185
    %558 = vmatprep.subr.mxu0 %v190
    %559 = vmatpush1.msra.mxu0 %v189
    %560 = vmatprep.subr.mxu0 %v194
    %561 = vmatpush1.msra.mxu0 %v193
    %562 = vmatprep.subr.mxu0 %v198
    %563 = vmatpush1.msra.mxu0 %v197
    %564 = vmatprep.subr.mxu0 %v202
    %565 = vmatpush1.msra.mxu0 %v201
    %566 = vmatprep.subr.mxu0 %v206
    %567 = vmatpush1.msra.mxu0 %v205
    %568 = vmatprep.subr.mxu0 %v210
    %569 = vmatpush1.msra.mxu0 %v209
    %570 = vmatprep.subr.mxu0 %v214
    %571 = vmatpush1.msra.mxu0 %v213
    %572 = vmatprep.subr.mxu0 %v218
    %573 = vmatpush1.msra.mxu0 %v217
    %574 = vmatprep.subr.mxu0 %v222
    %575 = vmatpush1.msra.mxu0 %v221
    %576 = vmatprep.subr.mxu0 %v226
    %577 = vmatpush1.msra.mxu0 %v225
    %578 = vmatprep.subr.mxu0 %v230
    %579 = vmatpush1.msra.mxu0 %v229
    %580 = vmatprep.subr.mxu0 %v234
    %581 = vmatpush1.msra.mxu0 %v233
    %582 = vmatprep.subr.mxu0 %v238
    %583 = vmatpush1.msra.mxu0 %v237
    %584 = vmatprep.subr.mxu0 %v242
    %585 = vmatpush1.msra.mxu0 %v241
    %586 = vmatprep.subr.mxu0 %v246
    %587 = vmatpush1.msra.mxu0 %v245
    %588 = vmatprep.subr.mxu0 %v250
    %589 = vmatpush1.msra.mxu0 %v249
    %590 = vmatprep.subr.mxu0 %v254
    %591 = vmatpush1.msra.mxu0 %v253
    %592 = vmatprep.subr.mxu0 %v258
    %593 = vmatpush1.msra.mxu0 %v257
    %594 = vmatprep.subr.mxu0 %v262
    %595 = vmatpush1.msra.mxu0 %v261
    %596 = vmatprep.subr.mxu0 %v266
    %597 = vmatpush1.msra.mxu0 %v265
    %598 = vmatprep.subr.mxu0 %v270
    %599 = vmatpush1.msra.mxu0 %v269
    %600 = vmatprep.subr.mxu0 %v274
    %601 = vmatpush1.msra.mxu0 %v273
    %602 = vmatprep.subr.mxu0 %v278
    %603 = vmatpush1.msra.mxu0 %v277
    %604 = vmatprep.subr.mxu0 %v282
    %605 = vmatpush1.msra.mxu0 %v281
    %606 = vmatprep.subr.mxu0 %v286
    %607 = vmatpush1.msra.mxu0 %v285
    %608 = vmatprep.subr.mxu0 %v290
    %609 = vmatpush1.msra.mxu0 %v289
    %610 = vmatprep.subr.mxu0 %v294
    %611 = vmatpush1.msra.mxu0 %v293
    %612 = vmatprep.mubr.f32.mxu0 %v34
    %613 = vmatmul.mubr.f32.gmra.mrb[0].mxu0 %v33
    %v614 = vpop.f32.mrb[0].mxu0
    %v615 = vadd.f32 %v538, %v614
    %v616 = vpop.f32.mrb[0].mxu0
    %v617 = vadd.f32 %v540, %v616
    %618 = vmatprep.mubr.f32.mxu0 %v38
    %619 = vmatmul.mubr.f32.gmra.mrb[0].mxu0 %v37
    %v620 = vpop.f32.mrb[0].mxu0
    %v621 = vadd.f32 %v544, %v620
    %v622 = vpop.f32.mrb[0].mxu0
    %v623 = vadd.f32 %v546, %v622
    %624 = vdwg.mxu0
    %v625 = vxor.u32 %v461, 2147483648
    %v626 = vxor.u32 %v463, 2147483648
    %v627 = vxor.u32 %v467, 2147483648
    %v628 = vxor.u32 %v469, 2147483648
    %v629 = vmul.f32 %v625, 1.442695
    %v630 = vpow.pop %v629
    %v631 = vmul.f32 %v626, 1.442695
    %v632 = vpow.pop %v631
    %v633 = vmul.f32 %v627, 1.442695
    %v634 = vpow.pop %v633
    %v635 = vmul.f32 %v628, 1.442695
    %v636 = vpow.pop %v635
    %v637 = vadd.f32 %v630, 1.0
    %v638 = vadd.f32 %v632, 1.0
    %v639 = vadd.f32 %v634, 1.0
    %v640 = vadd.f32 %v636, 1.0
    %v641 = vrcp.pop %v637
    %v642 = vmul.f32 1.0, %v641
    %v643 = vrcp.pop %v638
    %v644 = vmul.f32 1.0, %v643
    %v645 = vrcp.pop %v639
    %v646 = vmul.f32 1.0, %v645
    %v647 = vrcp.pop %v640
    %v648 = vmul.f32 1.0, %v647
    %v649 = vmul.f32 %v642, %v617
    %v650 = vmul.f32 %v646, %v623
    %v651 = vadd.f32 %v615, %v649
    %v652 = vadd.f32 %v621, %v650
    %v653 = vtanh.pop %v651
    %v654 = vtanh.pop %v652
    %v655 = vld [vmem:[%s1] sm:$0xff]
    %v656 = vld [vmem:[%s1 + $0x8] sm:$0xff]
    %v657 = vsub.f32 %v655, %v653
    %v658 = vsub.f32 %v656, %v654
    %v659 = vmul.f32 %v644, %v657
    %v660 = vmul.f32 %v648, %v658
    %v661 = vadd.f32 %v653, %v659
    %v662 = vadd.f32 %v654, %v660
    %663 = vst [vmem:[%s4] sm:$0xff] %v661
    %664 = vst [vmem:[%s4 + $0x8] sm:$0xff] %v662
    // Predicated region
    $region22: #{meta_gru_forward.1} parent=1 // pred_check
      _
    $region23: #{meta_gru_forward.1} parent=1 // pred_check_branch
      %666 = sbr.rel (0) target = $region25
    $region24: #{meta_gru_forward.1} parent=1 // pred_region
      _
    $region25: #{meta_gru_forward.1} parent=1 // pred_fallthru
      _
    // Predicated region
    $region26: #{meta_gru_forward.1} parent=1 // pred_check
      _
    $region27: #{meta_gru_forward.1} parent=1 // pred_check_branch
      %668 = sbr.rel (0) target = $region29
    $region28: #{meta_gru_forward.1} parent=1 // pred_region
      _
    $region29: #{meta_gru_forward.1} parent=1 // pred_fallthru
      _
    %669 = vsyncpa [#allocation3], 1

</llo_original>
